<compile_context>
chip_gen: v7x
topology: tpu7x:2x2x1
jax: 0.10.0
libtpu: 0.0.40
codegen_flags: <defaults>
</compile_context>

<pallas_src>
import jax
import jax.numpy as jnp
from jax.experimental import pallas as pl
from jax.experimental.pallas import tpu as pltpu


# Per-input-tile byte target and explicit scoped-VMEM limit (generation-safe:
# v5e/v6e have 128 MiB physical VMEM, v7x has 64 MiB; 48 MiB scoped leaves
# headroom everywhere while allowing ~6 MiB tiles double-buffered).
_TARGET_TILE_BYTES = 6 * 1024 * 1024
_VMEM_LIMIT_BYTES = 48 * 1024 * 1024


# ---------------------------------------------------------------------------
# Kernel bodies
# ---------------------------------------------------------------------------

def _scale_kernel(w_ref, x_ref, o_ref):
    # w_ref: VMEM (tm, 1)  -- per-row weight, lane-broadcast
    # x_ref: VMEM (tm, tn)
    # o_ref: VMEM (tm, tn)
    o_ref[...] = x_ref[...] * w_ref[...]


def _wsum_kernel(w_ref, x_ref, o_ref):
    # w_ref: VMEM (1, K, 1)
    # x_ref: VMEM (bn, K, tn)
    # o_ref: VMEM (bn, tn)   -- dense 2-D output block (no singleton channel)
    x32 = x_ref[...].astype(jnp.float32)
    w32 = w_ref[...].astype(jnp.float32)
    o_ref[...] = jnp.sum(x32 * w32, axis=1).astype(o_ref.dtype)


# ---------------------------------------------------------------------------
# Tiling helpers
# ---------------------------------------------------------------------------

def _round_up(v, m):
    return ((v + m - 1) // m) * m


def _round_down(v, m):
    return max(m, (v // m) * m)


def _split_if_single_step(tm, tn, rows, cols, row_mult, lane_mult=128):
    """If the 2-D parallel grid degenerates to a single step, split one axis
    in two so both v7x TensorCores get work (harmless ~0.35us on v5e/v6e)."""
    if pl.cdiv(rows, tm) * pl.cdiv(cols, tn) > 1:
        return tm, tn
    if tn % (2 * lane_mult) == 0:
        return tm, tn // 2
    if tm % (2 * row_mult) == 0:
        return tm // 2, tn
    return tm, tn


# ---------------------------------------------------------------------------
# Wrapper
# ---------------------------------------------------------------------------

def mt_spec_layer(x: jax.Array, w: jax.Array, k_out: bool = True) -> jax.Array:
    """Pallas implementation of mtSpecLayer.forward.

    x: (N, K, H, W) NCHW activations
    w: (K,) per-channel weights
    """
    N, K, H, W = x.shape
    HW = H * W
    dtype = x.dtype
    itemsize = jnp.dtype(dtype).itemsize

    # dtype-aware sublane multiple: 8 (f32), 16 (bf16/f16), 32 (int8/fp8).
    sub = 8 * max(1, 4 // itemsize)
    lane = 128
    target_elems = _TARGET_TILE_BYTES // itemsize

    cparams = pltpu.CompilerParams(
        dimension_semantics=("parallel", "parallel"),
        vmem_limit_bytes=_VMEM_LIMIT_BYTES,
    )

    hw_pad = _round_up(HW, lane)

    if k_out:
        # ----------------- per-channel scale: y[n,k] = w[k] * x[n,k] --------
        rows = N * K
        rows_pad = _round_up(rows, sub)

        xf = x.reshape(rows, HW)                             # lane-dense 2-D view
        # Per-row weight column: row r = n*K + k  ->  weight w[k].
        w_rows = jnp.broadcast_to(w[None, :], (N, K)).reshape(rows, 1)
        w_rows = w_rows.astype(dtype)

        needs_pad = (rows_pad != rows) or (hw_pad != HW)
        if needs_pad:
            xf = jnp.pad(xf, ((0, rows_pad - rows), (0, hw_pad - HW)))
            w_rows = jnp.pad(w_rows, ((0, rows_pad - rows), (0, 0)))

        # Prefer full-row tiles (one contiguous HBM burst per block); shrink
        # tm to respect the VMEM tile budget. Otherwise bound tn.
        if hw_pad * sub <= target_elems:
            tn = hw_pad
            tm = min(rows_pad, _round_down(target_elems // tn, sub))
        else:
            tm = sub
            tn = min(hw_pad, _round_down(target_elems // tm, lane))

        tm, tn = _split_if_single_step(tm, tn, rows_pad, hw_pad, sub, lane)
        grid = (pl.cdiv(rows_pad, tm), pl.cdiv(hw_pad, tn))

        out = pl.pallas_call(
            _scale_kernel,
            out_shape=jax.ShapeDtypeStruct((rows_pad, hw_pad), dtype),
            grid_spec=pltpu.PrefetchScalarGridSpec(
                num_scalar_prefetch=0,
                grid=grid,
                in_specs=[
                    pl.BlockSpec((tm, 1), lambda i, j: (i, 0)),
                    pl.BlockSpec((tm, tn), lambda i, j: (i, j)),
                ],
                out_specs=pl.BlockSpec((tm, tn), lambda i, j: (i, j)),
            ),
            compiler_params=cparams,
            cost_estimate=pl.CostEstimate(
                flops=rows * HW,
                transcendentals=0,
                bytes_accessed=(2 * rows * HW + rows) * itemsize,
            ),
        )(w_rows, xf)

        if needs_pad:
            out = out[:rows, :HW]
        return out.reshape(N, K, H, W)

    # ----------------- weighted channel sum (keepdim restored in wrapper) ---
    N_pad = _round_up(N, sub)
    xf = x.reshape(N, K, HW)                                 # lane-dense 3-D view
    needs_pad = (N_pad != N) or (hw_pad != HW)
    if needs_pad:
        xf = jnp.pad(xf, ((0, N_pad - N), (0, 0), (0, hw_pad - HW)))
    w3 = w.reshape(1, K, 1).astype(dtype)

    # VMEM accounting uses the sublane-padded K (minor dims of the input
    # block are (K, tn)).  Shrink tn first, then bn, to keep the input block
    # at ~_TARGET_TILE_BYTES even for large K.  (K so large that a single
    # (sub, K, 128) block exceeds the budget — K > ~1500 at f32 — would need a
    # K-tiled reduction grid axis; not expected for spectrogram channels.)
    K_sub = _round_up(K, sub)
    if hw_pad * K_sub * sub <= target_elems:
        tn = hw_pad
    else:
        tn = min(hw_pad, _round_down(target_elems // (K_sub * sub), lane))
    bn = min(N_pad, _round_down(target_elems // (K_sub * tn), sub))

    bn, tn = _split_if_single_step(bn, tn, N_pad, hw_pad, sub, lane)
    grid = (pl.cdiv(N_pad, bn), pl.cdiv(hw_pad, tn))

    out = pl.pallas_call(
        _wsum_kernel,
        out_shape=jax.ShapeDtypeStruct((N_pad, hw_pad), dtype),
        grid_spec=pltpu.PrefetchScalarGridSpec(
            num_scalar_prefetch=0,
            grid=grid,
            in_specs=[
                pl.BlockSpec((1, K, 1), lambda i, j: (0, 0, 0)),
                pl.BlockSpec((bn, K, tn), lambda i, j: (i, 0, j)),
            ],
            out_specs=pl.BlockSpec((bn, tn), lambda i, j: (i, j)),
        ),
        compiler_params=cparams,
        cost_estimate=pl.CostEstimate(
            flops=2 * N * K * HW,
            transcendentals=0,
            bytes_accessed=(N * K * HW + N * HW + K) * itemsize,
        ),
    )(w3, xf)

    if needs_pad:
        out = out[:N, :HW]
    return out.reshape(N, 1, H, W)


# ---------------------------------------------------------------------------
# Reference & test
# ---------------------------------------------------------------------------

def mt_spec_layer_ref(x, w, k_out=True):
    y = w.reshape(1, -1, 1, 1) * x
    if not k_out:
        y = jnp.sum(y, axis=1, keepdims=True)
    return y


if __name__ == "__main__":
    key = jax.random.PRNGKey(0)
    N, K, H, W = 2, 4, 16, 16

    x = jax.random.normal(key, (N, K, H, W), dtype=jnp.float32)
    # Deterministic parameter init matching torch.ones(K)/K from __init__.
    w = jnp.ones((K,), dtype=jnp.float32) / K

    # K_out = True : K channels out (per-channel scale)
    y_k = jax.block_until_ready(mt_spec_layer(x, w, k_out=True))
    # K_out = False: 1 channel out (weighted sum over channels)
    y_1 = jax.block_until_ready(mt_spec_layer(x, w, k_out=False))

    ref_k = mt_spec_layer_ref(x, w, k_out=True)
    ref_1 = mt_spec_layer_ref(x, w, k_out=False)

    assert y_k.shape == (N, K, H, W)
    assert y_1.shape == (N, 1, H, W)
    assert jnp.allclose(y_k, ref_k, atol=1e-6, rtol=1e-6)
    assert jnp.allclose(y_1, ref_1, atol=1e-6, rtol=1e-6)

    print("KERNEL_OK")
</pallas_src>

<mosaic_0001>
module attributes {stable_mosaic.version = 11 : i64} {
  func.func @_scale_kernel(%arg0: i32, %arg1: i32, %arg2: memref<8x1xf32, #tpu.memory_space<vmem>>, %arg3: memref<8x128xf32, #tpu.memory_space<vmem>>, %arg4: memref<8x128xf32, #tpu.memory_space<vmem>>) attributes {dimension_semantics = [#tpu.dimension_semantics<parallel>, #tpu.dimension_semantics<parallel>], iteration_bounds = array<i64: 1, 2>, scalar_prefetch = 0 : i64, scratch_operands = 0 : i64, tpu.core_type = #tpu.core_type<tc>, window_params = [{transform_indices = @transform_0, window_bounds = array<i64: 8, 1>}, {transform_indices = @transform_1, window_bounds = array<i64: 8, 128>}, {transform_indices = @transform_2, window_bounds = array<i64: 8, 128>}]} {
    %c0 = arith.constant 0 : index
    %c0_0 = arith.constant 0 : index
    %0 = vector.load %arg3[%c0, %c0_0] : memref<8x128xf32, #tpu.memory_space<vmem>>, vector<8x128xf32>
    %c0_1 = arith.constant 0 : index
    %c0_2 = arith.constant 0 : index
    %1 = vector.load %arg2[%c0_1, %c0_2] : memref<8x1xf32, #tpu.memory_space<vmem>>, vector<8x1xf32>
    %2 = vector.broadcast %1 : vector<8x1xf32> to vector<8x128xf32>
    %3 = arith.mulf %0, %2 : vector<8x128xf32>
    %c0_3 = arith.constant 0 : index
    %c0_4 = arith.constant 0 : index
    %4 = vector.load %arg4[%c0_3, %c0_4] : memref<8x128xf32, #tpu.memory_space<vmem>>, vector<8x128xf32>
    tpu.vector_store %arg4[%c0_3, %c0_4], %3 {strides = array<i32>} : memref<8x128xf32, #tpu.memory_space<vmem>>, vector<8x128xf32>,
    return
  }
  func.func @transform_0(%arg0: i32, %arg1: i32) -> (i32, i32) {
    %c0_i32 = arith.constant 0 : i32
    %c0_i32_0 = arith.constant 0 : i32
    return %arg0, %c0_i32 : i32, i32
  }
  func.func @transform_1(%arg0: i32, %arg1: i32) -> (i32, i32) {
    %c0_i32 = arith.constant 0 : i32
    return %arg0, %arg1 : i32, i32
  }
  func.func @transform_2(%arg0: i32, %arg1: i32) -> (i32, i32) {
    %c0_i32 = arith.constant 0 : i32
    return %arg0, %arg1 : i32, i32
  }
}

</mosaic_0001>

<llo_original>
// kernel: tpu_custom_call.1
$region0: #{tpu_custom_call.1}
  #allocation0 [shape = 'u32[]', space=smem, size = 0x4, offset = 0x4, fixed_abs, tag = 'smem constant byte address 0x4 - core index']
  #allocation1 [shape = 'u32[144,128]{1,0:T(1,128)}', space=vmem, size = 0x12000, scoped, tag = 'internal scratch']
  %s0 = inlined_call_operand.vmem [shape: f32[8,1], index: 0, kind: input, shape index: {}]
  %s1 = inlined_call_operand.hbm [shape: f32[8,256], index: 1, kind: input, shape index: {}]
  %s2 = inlined_call_operand.hbm [shape: f32[8,256], index: 2, kind: output, shape index: {}]
  %s3 = sld [smem:[#allocation0]]
  $region45: #{tpu_custom_call.1} parent=0
    _
  %s5 = ssub.s32 1, %s3
  %s6 = scalar_select 0, %s5, %s3
  $region1: #{tpu_custom_call.1} parent=0
    #allocation2 [shape = 'u8[8192]{0}', space=vmem, size = 0x2000, scoped, tag = 'input window, operand 1']
    #allocation3 [shape = 's32[2]{0}', space=sflag, size = 0x8, scoped, tag = 'scoped memory for tpu_custom_call.1']
    #allocation4 [shape = 's32[2]{0}', space=sflag, size = 0x8, scoped, tag = 'scoped memory for tpu_custom_call.1']
    #allocation5 [shape = 'u8[8192]{0}', space=vmem, size = 0x2000, scoped, tag = 'output window, operand 0']
    %7 = vsyncpa [#allocation3], 0
    %s8 = scalar_lea.sflag [#allocation3], 1
    %9 = vsyncpa %s8, 0
    %10 = vsyncpa [#allocation4], 0
    %s11 = scalar_lea.sflag [#allocation4], 1
    %12 = vsyncpa %s11, 0
    loop: start=0, step=1, limit=4
    $region2: #{tpu_custom_call.1} parent=1 // loop_pre_header
      _
    $region3: #{tpu_custom_call.1} parent=1 // loop_header
      %s14 = sphi 0, %s18
      %p15 = scmp.ge.s32.totalorder %s14, 4
      %s21 = sphi 0, %s33
      %s22 = sphi 0, %s29
      %s23 = sphi 0, %s21
      %s24 = sphi 0, %s22
      %s25 = sphi 0, %s23
      %s26 = sphi 0, %s24
      %s36 = sphi 0, %s38
      %s39 = sphi 0, %s36
      %s40 = sphi 0, %s39
      %s56 = sphi 0, %s40
      %s64 = sphi 0, %s66
      %s67 = sphi 0, %s64
      %s68 = sphi 0, %s67
      %s84 = sphi 0, %s68
      %s92 = sphi 0, %s94
      %s95 = sphi 0, %s92
      %s96 = sphi 0, %s95
      %s112 = sphi 0, %s96
    $region4: #{tpu_custom_call.1} parent=1 // loop_header_branch
      %17 = sbr.rel (%p15) target = $region8
    $region5: #{tpu_custom_call.1} parent=1 // loop_body
      %s19 = ssub.s32 %s14, 1
      %s20 = ssub.s32 %s14, 2
      %s27 = sadd.s32 1, %s22
      %p28 = scmp.ge.s32.totalorder %s27, 2
      %s29 = scalar_select %p28, 0, %s27
      %s30 = sadd.s32 1, %s21
      %s31 = scalar_select %p28, %s30, %s21
      %p32 = scmp.ge.s32.totalorder %s31, 1
      %s33 = scalar_select %p32, 0, %s31
      %s34 = ssub.s32 %s21, %s33
      %p35 = scmp.eq.s32.totalorder %s34, 0
      %s37 = sadd.s32 %s36, 1
      %s38 = scalar_select %p35, %s36, %s37
      %p41 = pneg %p35
      %p42 = scmp.eq.s32.totalorder %s14, 1
      %p43 = por %p41, %p42
      %p44 = scmp.ne.s32.totalorder %s36, %s39
      %p45 = scmp.eq.s32.totalorder %s14, 0
      %p46 = por %p44, %p45
      %p47 = scmp.ne.s32.totalorder %s36, %s39
      %p48 = scmp.eq.s32.totalorder %s19, 1
      %p49 = por %p47, %p48
      %p50 = scmp.ne.s32.totalorder %s39, %s40
      %p51 = scmp.eq.s32.totalorder %s19, 0
      %p52 = por %p50, %p51
      %p53 = scmp.ne.s32.totalorder %s39, %s40
      %p54 = scmp.eq.s32.totalorder %s20, 1
      %p55 = por %p53, %p54
      %p57 = scmp.ne.s32.totalorder %s40, %s56
      %p58 = scmp.eq.s32.totalorder %s20, 0
      %p59 = por %p57, %p58
      %s60 = ssub.s32 %s21, %s33
      %s61 = ssub.s32 %s22, %s29
      %s62 = sor.u32 %s60, %s61
      %p63 = scmp.eq.s32.totalorder %s62, 0
      %s65 = sadd.s32 %s64, 1
      %s66 = scalar_select %p63, %s64, %s65
      %p69 = pneg %p63
      %p70 = scmp.eq.s32.totalorder %s14, 1
      %p71 = por %p69, %p70
      %p72 = scmp.ne.s32.totalorder %s64, %s67
      %p73 = scmp.eq.s32.totalorder %s14, 0
      %p74 = por %p72, %p73
      %p75 = scmp.ne.s32.totalorder %s64, %s67
      %p76 = scmp.eq.s32.totalorder %s19, 1
      %p77 = por %p75, %p76
      %p78 = scmp.ne.s32.totalorder %s67, %s68
      %p79 = scmp.eq.s32.totalorder %s19, 0
      %p80 = por %p78, %p79
      %p81 = scmp.ne.s32.totalorder %s67, %s68
      %p82 = scmp.eq.s32.totalorder %s20, 1
      %p83 = por %p81, %p82
      %p85 = scmp.ne.s32.totalorder %s68, %s84
      %p86 = scmp.eq.s32.totalorder %s20, 0
      %p87 = por %p85, %p86
      %s88 = ssub.s32 %s21, %s33
      %s89 = ssub.s32 %s22, %s29
      %s90 = sor.u32 %s88, %s89
      %p91 = scmp.eq.s32.totalorder %s90, 0
      %s93 = sadd.s32 %s92, 1
      %s94 = scalar_select %p91, %s92, %s93
      %p97 = pneg %p91
      %p98 = scmp.eq.s32.totalorder %s14, 1
      %p99 = por %p97, %p98
      %p100 = scmp.ne.s32.totalorder %s92, %s95
      %p101 = scmp.eq.s32.totalorder %s14, 0
      %p102 = por %p100, %p101
      %p103 = scmp.ne.s32.totalorder %s92, %s95
      %p104 = scmp.eq.s32.totalorder %s19, 1
      %p105 = por %p103, %p104
      %p106 = scmp.ne.s32.totalorder %s95, %s96
      %p107 = scmp.eq.s32.totalorder %s19, 0
      %p108 = por %p106, %p107
      %p109 = scmp.ne.s32.totalorder %s95, %s96
      %p110 = scmp.eq.s32.totalorder %s20, 1
      %p111 = por %p109, %p110
      %p113 = scmp.ne.s32.totalorder %s96, %s112
      %p114 = scmp.eq.s32.totalorder %s20, 0
      %p115 = por %p113, %p114
      %p116 = scmp.le.s32.totalorder 1, %s14
      %p117 = scmp.lt.s32.totalorder %s14, 3
      %p118 = pnand %p116, %p117
      %p119 = pneg %p118
      // Predicated region
      $region9: #{tpu_custom_call.1} parent=5 // pred_check
        _
      $region10: #{tpu_custom_call.1} parent=5 // pred_check_branch
        %121 = sbr.rel (%p118) target = $region12
      $region11: #{tpu_custom_call.1} parent=5 // pred_region
        %s122 = ssub.s32 %s14, 1
        // Predicated region
        $region13: #{tpu_custom_call.1} parent=11 // pred_check
          %p123 = pneg %p52
        $region14: #{tpu_custom_call.1} parent=11 // pred_check_branch
          %125 = sbr.rel (%p123) target = $region16
        $region15: #{tpu_custom_call.1} parent=11 // pred_region
          %p126 = scmp.lt.s32.totalorder %s23, 0
          %s127 = scalar_select %p126, %s23, 0
          %s128 = smul.addr %s127, 8
          %s129 = scalar_lea.vmem %s0, %s128
        $region16: #{tpu_custom_call.1} parent=11 // pred_fallthru
          _
      $region12: #{tpu_custom_call.1} parent=5 // pred_fallthru
        _
      %p130 = scmp.lt.s32.totalorder %s14, 2
      // Predicated region
      $region17: #{tpu_custom_call.1} parent=5 // pred_check
        %p131 = pneg %p130
      $region18: #{tpu_custom_call.1} parent=5 // pred_check_branch
        %133 = sbr.rel (%p131) target = $region20
      $region19: #{tpu_custom_call.1} parent=5 // pred_region
        // Predicated region
        $region21: #{tpu_custom_call.1} parent=19 // pred_check
          %p134 = pneg %p74
        $region22: #{tpu_custom_call.1} parent=19 // pred_check_branch
          %136 = sbr.rel (%p134) target = $region24
        $region23: #{tpu_custom_call.1} parent=19 // pred_region
          %s137 = sand.u32 %s64, 1
          %s138 = scalar_lea.sflag [#allocation3], %s137
          %s139 = sand.u32 %s64, 1
          %s140 = smul.addr %s139, 8
          %s141 = scalar_lea.vmem [#allocation2], %s140
          %s143 = ssub.s32 128, 128
          %144 = vsyncadd %s138, %s143
          %s145 = smul.addr %s21, 2
          %s146 = sadd.s32 %s22, %s145
          %s147 = smul.addr %s146, 128
          %s148 = scalar_lea.hbm %s1, %s147
          %s150 = sshll.u32 %s141, 4
          %s151 = int_to_ptr.vmem [resolvable:$true] %s150
          %153 = dma.hbm_to_vmem [thread:$0]  %s148, 128, %s151, %s138
        $region24: #{tpu_custom_call.1} parent=19 // pred_fallthru
          _
      $region20: #{tpu_custom_call.1} parent=5 // pred_fallthru
        _
      %p154 = scmp.le.s32.totalorder 1, %s14
      %p155 = scmp.lt.s32.totalorder %s14, 3
      %p156 = pnand %p154, %p155
      %p157 = pneg %p156
      // Predicated region
      $region25: #{tpu_custom_call.1} parent=5 // pred_check
        _
      $region26: #{tpu_custom_call.1} parent=5 // pred_check_branch
        %159 = sbr.rel (%p156) target = $region28
      $region27: #{tpu_custom_call.1} parent=5 // pred_region
        %s160 = ssub.s32 %s14, 1
        %s161 = sand.u32 %s67, 1
        %s162 = scalar_lea.sflag [#allocation3], %s161
        %s163 = sand.u32 %s67, 1
        %s164 = smul.addr %s163, 8
        %s165 = scalar_lea.vmem [#allocation2], %s164
        // Predicated region
        $region29: #{tpu_custom_call.1} parent=27 // pred_check
          %p166 = pneg %p80
        $region30: #{tpu_custom_call.1} parent=27 // pred_check_branch
          %168 = sbr.rel (%p166) target = $region32
        $region31: #{tpu_custom_call.1} parent=27 // pred_region
          %169 = dma.done %s162, 128
        $region32: #{tpu_custom_call.1} parent=27 // pred_fallthru
          _
        %p170 = scmp.lt.s32.totalorder %s23, 0
        %s171 = scalar_select %p170, %s23, 0
        %s172 = smul.addr %s171, 8
        %s173 = scalar_lea.vmem %s0, %s172
        %p174 = pneg %p52
        %p175 = pneg %p49
        %s176 = sand.u32 %s67, 1
        %s177 = scalar_lea.sflag [#allocation3], %s176
        %s178 = sand.u32 %s67, 1
        %s179 = smul.addr %s178, 8
        %s180 = scalar_lea.vmem [#allocation2], %s179
        %p181 = pneg %p80
        %p182 = pneg %p77
        %p183 = pneg %p108
        %p184 = pneg %p105
        %s185 = sand.u32 %s95, 1
        %s186 = scalar_lea.sflag [#allocation4], %s185
        %s187 = sand.u32 %s95, 1
        %s188 = smul.addr %s187, 8
        %s189 = scalar_lea.vmem [#allocation5], %s188
        %p190 = scmp.lt.s32.totalorder %s23, 0
        %s191 = scalar_select %p190, %s23, 0
        %s192 = smul.addr %s191, 8
        %s193 = scalar_lea.vmem %s0, %s192
        %v194 = vld [vmem:[%s165] sm:$0xff]
        %v195 = vld [vmem:[%s193] sm:$0xff]
        %197 = vset.pattern.permute.xlu0 0
        %198 = vperm.xlu0 %197, %v195
        %v199 = vpop.permute.xlu0 %198
        %v201 = vmul.f32 %v194, %v199
        %202 = vst [vmem:[%s189] sm:$0xff] %v201
        %s203 = sand.u32 %s95, 1
        %s204 = scalar_lea.sflag [#allocation4], %s203
        %s205 = sand.u32 %s95, 1
        %s206 = smul.addr %s205, 8
        %s207 = scalar_lea.vmem [#allocation5], %s206
        // Predicated region
        $region33: #{tpu_custom_call.1} parent=27 // pred_check
          %p208 = pneg %p105
        $region34: #{tpu_custom_call.1} parent=27 // pred_check_branch
          %210 = sbr.rel (%p208) target = $region36
        $region35: #{tpu_custom_call.1} parent=27 // pred_region
          %s212 = ssub.s32 128, 128
          %213 = vsyncadd %s204, %s212
          %s214 = smul.addr %s23, 2
          %s215 = sadd.s32 %s24, %s214
          %s216 = smul.addr %s215, 128
          %s217 = scalar_lea.hbm %s2, %s216
          %s219 = sshll.u32 %s207, 4
          %s220 = int_to_ptr.vmem [resolvable:$true] %s219
          %222 = dma.vmem_to_hbm [thread:$0]  %s220, 128, %s217, %s204
        $region36: #{tpu_custom_call.1} parent=27 // pred_fallthru
          _
      $region28: #{tpu_custom_call.1} parent=5 // pred_fallthru
        _
      %p223 = scmp.le.s32.totalorder 2, %s14
      // Predicated region
      $region37: #{tpu_custom_call.1} parent=5 // pred_check
        %p224 = pneg %p223
      $region38: #{tpu_custom_call.1} parent=5 // pred_check_branch
        %226 = sbr.rel (%p224) target = $region40
      $region39: #{tpu_custom_call.1} parent=5 // pred_region
        %s227 = ssub.s32 %s14, 2
        // Predicated region
        $region41: #{tpu_custom_call.1} parent=39 // pred_check
          %p228 = pneg %p111
        $region42: #{tpu_custom_call.1} parent=39 // pred_check_branch
          %230 = sbr.rel (%p228) target = $region44
        $region43: #{tpu_custom_call.1} parent=39 // pred_region
          %s231 = sand.u32 %s96, 1
          %s232 = scalar_lea.sflag [#allocation4], %s231
          %s233 = sand.u32 %s96, 1
          %s234 = smul.addr %s233, 8
          %s235 = scalar_lea.vmem [#allocation5], %s234
          %236 = dma.done %s232, 128
        $region44: #{tpu_custom_call.1} parent=39 // pred_fallthru
          _
      $region40: #{tpu_custom_call.1} parent=5 // pred_fallthru
        _
    $region6: #{tpu_custom_call.1} parent=1 // loop_footer
      %s18 = sadd.s32 1, %s14
    $region7: #{tpu_custom_call.1} parent=1 // loop_footer_branch
      %13 = sbr.rel target = $region3
    $region8: #{tpu_custom_call.1} parent=1 // loop_exit
      _
    %237 = vsyncpa [#allocation3], 1
    %s238 = scalar_lea.sflag [#allocation3], 1
    %239 = vsyncpa %s238, 1
    %240 = vsyncpa [#allocation4], 1
    %s241 = scalar_lea.sflag [#allocation4], 1
    %242 = vsyncpa %s241, 1

</llo_original>
